<compile_context>
chip_gen: v5e
topology: v5e:2x2
jax: 0.10.0
libtpu: 0.0.40
codegen_flags: <defaults>
</compile_context>

<pallas_src>
import functools

import jax
import jax.numpy as jnp
import numpy as np
from jax import lax
from jax.experimental import pallas as pl
from jax.experimental.pallas import tpu as pltpu

_LANE = 128
_MIB = 1024 * 1024


def _dice_kernel(x_ref, t_ref, inter_out_ref, denom_out_ref,
                 inter_acc, denom_acc, *, rows_total, tile_r, has_tail):
    r = pl.program_id(1)

    @pl.when(r == 0)
    def _init():
        inter_acc[...] = jnp.zeros_like(inter_acc)
        denom_acc[...] = jnp.zeros_like(denom_acc)

    x = x_ref[0].astype(jnp.float32)   # (C, tile_r, L)
    t = t_ref[0].astype(jnp.float32)   # (C, tile_r, L)

    if has_tail:
        # Final partial tile: rows past the array end hold unspecified data.
        # Zero them (zero is sum-neutral for both x*t and x+t).  For non-last
        # steps `valid >= tile_r`, so the mask is all-true and cheap.
        valid = rows_total - r * tile_r
        row = lax.broadcasted_iota(jnp.int32, x.shape, 1)
        keep = row < valid
        x = jnp.where(keep, x, 0.0)
        t = jnp.where(keep, t, 0.0)

    # Hot path: one mul + one add per element (VPU) plus a sublane reduction
    # (XLU) into tiny (C, L) accumulators -- no large scratch stores.
    inter_acc[...] += jnp.sum(x * t, axis=1)
    denom_acc[...] += jnp.sum(x + t, axis=1)

    @pl.when(r == pl.num_programs(1) - 1)
    def _finalize():
        inter_out_ref[0] = inter_acc[...]
        denom_out_ref[0] = denom_acc[...]


def _vmem_capacity_bytes():
    try:
        cap = int(pltpu.get_tpu_info().vmem_capacity_bytes)
        if cap > 0:
            return cap
    except Exception:
        pass
    return 64 * _MIB   # conservative fallback (v7x per-TensorCore VMEM)


def _sublane_multiple(*dtypes):
    # Native sublane tile: f32 -> 8, bf16 -> 16, int8/fp8 -> 32.
    return max(max(8, 8 * (4 // max(1, jnp.dtype(d).itemsize))) for d in dtypes)


def dice_loss_pallas(inputs, targets, num_class, smooth=1.0, *,
                     max_block_bytes=8 * _MIB):
    """inputs/targets: (B, C, H, W) -> scalar loss (float32)."""
    B, C, H, W = inputs.shape
    assert C == num_class
    HW = H * W

    # Layout: never materialize a padded copy.
    if HW % _LANE == 0:
        R, L = HW // _LANE, _LANE               # free, contiguous reshape
        x = inputs.reshape(B, C, R, L)
        t = targets.reshape(B, C, R, L)
    else:
        R, L = H, W                             # stream native NCHW directly
        x, t = inputs, targets

    lanes = -(-L // _LANE) * _LANE              # VMEM lane padding of last dim
    sub = _sublane_multiple(inputs.dtype, targets.dtype)
    per_row_bytes = C * lanes * (inputs.dtype.itemsize + targets.dtype.itemsize)

    # Generation-aware VMEM budget (v5e/v6e: 128 MiB, v7x: 64 MiB per core).
    cap = _vmem_capacity_bytes()
    vmem_limit = max(32 * _MIB, min(cap - 16 * _MIB, 64 * _MIB))
    inputs_budget = min(4 * max_block_bytes, vmem_limit - 4 * _MIB)
    max_tile_r = max(sub, inputs_budget // (2 * per_row_bytes))  # 2x: dbl-buf

    if R <= max_tile_r:
        tile_r = R          # single tile per batch (full-dim block is legal)
    else:
        tile_r = (max_tile_r // sub) * sub
        steps = -(-R // tile_r)
        # Prefer a multiple-of-`sub` divisor of R that keeps the same number
        # of grid steps (no partial tail block, no in-kernel masking).
        d_lo = max(sub, -(-R // steps))
        d = tile_r
        while d >= d_lo:
            if R % d == 0:
                tile_r = d
                break
            d -= sub

    grid_r = -(-R // tile_r)
    has_tail = grid_r * tile_r != R

    kernel = functools.partial(_dice_kernel, rows_total=R, tile_r=tile_r,
                               has_tail=has_tail)

    inter_p, denom_p = pl.pallas_call(
        kernel,
        out_shape=(jax.ShapeDtypeStruct((B, C, L), jnp.float32),
                   jax.ShapeDtypeStruct((B, C, L), jnp.float32)),
        grid_spec=pltpu.PrefetchScalarGridSpec(
            num_scalar_prefetch=0,
            grid=(B, grid_r),
            in_specs=[
                pl.BlockSpec((1, C, tile_r, L), lambda b, r: (b, 0, r, 0)),
                pl.BlockSpec((1, C, tile_r, L), lambda b, r: (b, 0, r, 0)),
            ],
            out_specs=[
                pl.BlockSpec((1, C, L), lambda b, r: (b, 0, 0)),
                pl.BlockSpec((1, C, L), lambda b, r: (b, 0, 0)),
            ],
            scratch_shapes=[
                pltpu.VMEM((C, L), jnp.float32),
                pltpu.VMEM((C, L), jnp.float32),
            ],
        ),
        compiler_params=pltpu.CompilerParams(
            dimension_semantics=("parallel", "arbitrary"),
            vmem_limit_bytes=int(vmem_limit),
        ),
    )(x, t)

    # Tiny epilogue: combine per-batch / per-lane partials into the loss.
    inter = jnp.sum(inter_p, axis=(0, 2))       # (C,)
    denom = jnp.sum(denom_p, axis=(0, 2))       # (C,)
    dice = (2.0 * inter + smooth) / (denom + smooth)
    return (1.0 - jnp.sum(dice) / num_class).astype(jnp.float32)


def dice_loss_ref(inputs, targets, num_class, smooth=1.0):
    """Pure-JAX reference mirroring the PyTorch module."""
    dice = 0.0
    for c in range(num_class):
        xi = inputs[:, c, ...].reshape(-1).astype(jnp.float32)
        ti = targets[:, c, ...].reshape(-1).astype(jnp.float32)
        inter = jnp.sum(xi * ti)
        dice += (2.0 * inter + smooth) / (jnp.sum(xi) + jnp.sum(ti) + smooth)
    return 1.0 - dice / num_class


def _make_data(key, B, C, H, W, dtype=jnp.float32):
    k1, k2 = jax.random.split(key)
    inputs = jax.random.uniform(k1, (B, C, H, W), dtype=jnp.float32)
    labels = jax.random.randint(k2, (B, H, W), 0, C)
    targets = jax.nn.one_hot(labels, C, dtype=jnp.float32)
    targets = jnp.transpose(targets, (0, 3, 1, 2))  # -> (B, C, H, W)
    return inputs.astype(dtype), targets.astype(dtype)


if __name__ == "__main__":
    key = jax.random.PRNGKey(0)
    k_a, k_b, k_c = jax.random.split(key, 3)
    smooth = 1.0

    # Test 1: canonical small shape; HW % 128 == 0 -> flattened lane-dense
    # layout, single tile per batch.
    B, C, H, W = 2, 4, 16, 16
    inputs, targets = _make_data(k_a, B, C, H, W)
    loss = jax.block_until_ready(dice_loss_pallas(inputs, targets, C, smooth))
    ref = dice_loss_ref(inputs, targets, C, smooth)
    np.testing.assert_allclose(np.asarray(loss), np.asarray(ref),
                               rtol=1e-5, atol=1e-5)

    # Test 2: HW % 128 != 0 -> native NCHW streaming path; tiny block budget
    # forces multi-tile grid with a masked partial tail (no jnp.pad copy).
    B2, C2, H2, W2 = 2, 4, 36, 36
    inputs2, targets2 = _make_data(k_b, B2, C2, H2, W2)
    loss2 = jax.block_until_ready(
        dice_loss_pallas(inputs2, targets2, C2, smooth, max_block_bytes=4096))
    ref2 = dice_loss_ref(inputs2, targets2, C2, smooth)
    np.testing.assert_allclose(np.asarray(loss2), np.asarray(ref2),
                               rtol=1e-5, atol=1e-5)

    # Test 3: bf16 inputs (dtype-aware sublane=16), flattened path with a
    # masked partial tail.
    B3, C3, H3, W3 = 2, 4, 48, 48
    inputs3, targets3 = _make_data(k_c, B3, C3, H3, W3, dtype=jnp.bfloat16)
    loss3 = jax.block_until_ready(
        dice_loss_pallas(inputs3, targets3, C3, smooth, max_block_bytes=4096))
    ref3 = dice_loss_ref(inputs3, targets3, C3, smooth)
    np.testing.assert_allclose(np.asarray(loss3), np.asarray(ref3),
                               rtol=1e-4, atol=1e-4)

    print("KERNEL_OK")
</pallas_src>

<mosaic_0001>
module attributes {stable_mosaic.version = 11 : i64} {
  func.func @_dice_kernel(%arg0: i32, %arg1: i32, %arg2: memref<1x4x2x128xf32, #tpu.memory_space<vmem>>, %arg3: memref<1x4x2x128xf32, #tpu.memory_space<vmem>>, %arg4: memref<1x4x128xf32, #tpu.memory_space<vmem>>, %arg5: memref<1x4x128xf32, #tpu.memory_space<vmem>>, %arg6: memref<4x128xf32, #tpu.memory_space<vmem>>, %arg7: memref<4x128xf32, #tpu.memory_space<vmem>>) attributes {dimension_semantics = [#tpu.dimension_semantics<parallel>, #tpu.dimension_semantics<arbitrary>], iteration_bounds = array<i64: 2, 1>, scalar_prefetch = 0 : i64, scratch_operands = 2 : i64, tpu.core_type = #tpu.core_type<tc>, window_params = [{transform_indices = @transform_0, window_bounds = array<i64: 1, 4, 2, 128>}, {transform_indices = @transform_1, window_bounds = array<i64: 1, 4, 2, 128>}, {transform_indices = @transform_2, window_bounds = array<i64: 1, 4, 128>}, {transform_indices = @transform_3, window_bounds = array<i64: 1, 4, 128>}]} {
    %c0_i32 = arith.constant 0 : i32
    %0 = arith.cmpi eq, %arg1, %c0_i32 : i32
    %1 = arith.extui %0 : i1 to i32
    %c0_i32_0 = arith.constant 0 : i32
    %2 = arith.cmpi ne, %1, %c0_i32_0 : i32
    scf.if %2 {
      %cst_19 = arith.constant 0.000000e+00 : f32
      %20 = vector.broadcast %cst_19 : f32 to vector<4x128xf32>
      %c0_20 = arith.constant 0 : index
      %c0_21 = arith.constant 0 : index
      %21 = vector.load %arg6[%c0_20, %c0_21] : memref<4x128xf32, #tpu.memory_space<vmem>>, vector<4x128xf32>
      tpu.vector_store %arg6[%c0_20, %c0_21], %20 {strides = array<i32>} : memref<4x128xf32, #tpu.memory_space<vmem>>, vector<4x128xf32>,
      %cst_22 = arith.constant 0.000000e+00 : f32
      %22 = vector.broadcast %cst_22 : f32 to vector<4x128xf32>
      %c0_23 = arith.constant 0 : index
      %c0_24 = arith.constant 0 : index
      %23 = vector.load %arg7[%c0_23, %c0_24] : memref<4x128xf32, #tpu.memory_space<vmem>>, vector<4x128xf32>
      tpu.vector_store %arg7[%c0_23, %c0_24], %22 {strides = array<i32>} : memref<4x128xf32, #tpu.memory_space<vmem>>, vector<4x128xf32>,
    } else {
    }
    %c0 = arith.constant 0 : index
    %c0_1 = arith.constant 0 : index
    %c0_2 = arith.constant 0 : index
    %c0_3 = arith.constant 0 : index
    %3 = vector.load %arg2[%c0, %c0_1, %c0_2, %c0_3] : memref<1x4x2x128xf32, #tpu.memory_space<vmem>>, vector<1x4x2x128xf32>
    %4 = vector.shape_cast %3 : vector<1x4x2x128xf32> to vector<4x2x128xf32>
    %c0_4 = arith.constant 0 : index
    %c0_5 = arith.constant 0 : index
    %c0_6 = arith.constant 0 : index
    %c0_7 = arith.constant 0 : index
    %5 = vector.load %arg3[%c0_4, %c0_5, %c0_6, %c0_7] : memref<1x4x2x128xf32, #tpu.memory_space<vmem>>, vector<1x4x2x128xf32>
    %6 = vector.shape_cast %5 : vector<1x4x2x128xf32> to vector<4x2x128xf32>
    %c0_8 = arith.constant 0 : index
    %c0_9 = arith.constant 0 : index
    %7 = vector.load %arg6[%c0_8, %c0_9] : memref<4x128xf32, #tpu.memory_space<vmem>>, vector<4x128xf32>
    %8 = arith.mulf %4, %6 : vector<4x2x128xf32>
    %cst = arith.constant dense<0.000000e+00> : vector<4x128xf32>
    %9 = vector.multi_reduction <add>, %8, %cst [1] : vector<4x2x128xf32> to vector<4x128xf32>
    %10 = arith.addf %7, %9 : vector<4x128xf32>
    %c0_10 = arith.constant 0 : index
    %c0_11 = arith.constant 0 : index
    %11 = vector.load %arg6[%c0_10, %c0_11] : memref<4x128xf32, #tpu.memory_space<vmem>>, vector<4x128xf32>
    tpu.vector_store %arg6[%c0_10, %c0_11], %10 {strides = array<i32>} : memref<4x128xf32, #tpu.memory_space<vmem>>, vector<4x128xf32>,
    %c0_12 = arith.constant 0 : index
    %c0_13 = arith.constant 0 : index
    %12 = vector.load %arg7[%c0_12, %c0_13] : memref<4x128xf32, #tpu.memory_space<vmem>>, vector<4x128xf32>
    %13 = arith.addf %4, %6 : vector<4x2x128xf32>
    %cst_14 = arith.constant dense<0.000000e+00> : vector<4x128xf32>
    %14 = vector.multi_reduction <add>, %13, %cst_14 [1] : vector<4x2x128xf32> to vector<4x128xf32>
    %15 = arith.addf %12, %14 : vector<4x128xf32>
    %c0_15 = arith.constant 0 : index
    %c0_16 = arith.constant 0 : index
    %16 = vector.load %arg7[%c0_15, %c0_16] : memref<4x128xf32, #tpu.memory_space<vmem>>, vector<4x128xf32>
    tpu.vector_store %arg7[%c0_15, %c0_16], %15 {strides = array<i32>} : memref<4x128xf32, #tpu.memory_space<vmem>>, vector<4x128xf32>,
    %c0_i32_17 = arith.constant 0 : i32
    %17 = arith.cmpi eq, %arg1, %c0_i32_17 : i32
    %18 = arith.extui %17 : i1 to i32
    %c0_i32_18 = arith.constant 0 : i32
    %19 = arith.cmpi ne, %18, %c0_i32_18 : i32
    scf.if %19 {
      %c0_19 = arith.constant 0 : index
      %c0_20 = arith.constant 0 : index
      %20 = vector.load %arg6[%c0_19, %c0_20] : memref<4x128xf32, #tpu.memory_space<vmem>>, vector<4x128xf32>
      %c0_21 = arith.constant 0 : index
      %c0_22 = arith.constant 0 : index
      %c0_23 = arith.constant 0 : index
      %21 = vector.load %arg4[%c0_21, %c0_22, %c0_23] : memref<1x4x128xf32, #tpu.memory_space<vmem>>, vector<1x4x128xf32>
      %22 = vector.shape_cast %21 : vector<1x4x128xf32> to vector<4x128xf32>
      %23 = vector.shape_cast %20 : vector<4x128xf32> to vector<1x4x128xf32>
      tpu.vector_store %arg4[%c0_21, %c0_22, %c0_23], %23 {strides = array<i32>} : memref<1x4x128xf32, #tpu.memory_space<vmem>>, vector<1x4x128xf32>,
      %c0_24 = arith.constant 0 : index
      %c0_25 = arith.constant 0 : index
      %24 = vector.load %arg7[%c0_24, %c0_25] : memref<4x128xf32, #tpu.memory_space<vmem>>, vector<4x128xf32>
      %c0_26 = arith.constant 0 : index
      %c0_27 = arith.constant 0 : index
      %c0_28 = arith.constant 0 : index
      %25 = vector.load %arg5[%c0_26, %c0_27, %c0_28] : memref<1x4x128xf32, #tpu.memory_space<vmem>>, vector<1x4x128xf32>
      %26 = vector.shape_cast %25 : vector<1x4x128xf32> to vector<4x128xf32>
      %27 = vector.shape_cast %24 : vector<4x128xf32> to vector<1x4x128xf32>
      tpu.vector_store %arg5[%c0_26, %c0_27, %c0_28], %27 {strides = array<i32>} : memref<1x4x128xf32, #tpu.memory_space<vmem>>, vector<1x4x128xf32>,
    } else {
    }
    return
  }
  func.func @transform_0(%arg0: i32, %arg1: i32) -> (i32, i32, i32, i32) {
    %c0_i32 = arith.constant 0 : i32
    %c0_i32_0 = arith.constant 0 : i32
    %c0_i32_1 = arith.constant 0 : i32
    return %arg0, %c0_i32, %arg1, %c0_i32_0 : i32, i32, i32, i32
  }
  func.func @transform_1(%arg0: i32, %arg1: i32) -> (i32, i32, i32, i32) {
    %c0_i32 = arith.constant 0 : i32
    %c0_i32_0 = arith.constant 0 : i32
    %c0_i32_1 = arith.constant 0 : i32
    return %arg0, %c0_i32, %arg1, %c0_i32_0 : i32, i32, i32, i32
  }
  func.func @transform_2(%arg0: i32, %arg1: i32) -> (i32, i32, i32) {
    %c0_i32 = arith.constant 0 : i32
    %c0_i32_0 = arith.constant 0 : i32
    %c0_i32_1 = arith.constant 0 : i32
    return %arg0, %c0_i32, %c0_i32_0 : i32, i32, i32
  }
  func.func @transform_3(%arg0: i32, %arg1: i32) -> (i32, i32, i32) {
    %c0_i32 = arith.constant 0 : i32
    %c0_i32_0 = arith.constant 0 : i32
    %c0_i32_1 = arith.constant 0 : i32
    return %arg0, %c0_i32, %c0_i32_0 : i32, i32, i32
  }
}

</mosaic_0001>

<llo_original>
// kernel: tpu_custom_call.1
$region0: #{tpu_custom_call.1}
  #allocation0 [shape = 'u32[]', space=smem, size = 0x4, offset = 0x4, fixed_abs, tag = 'smem constant byte address 0x4 - core index']
  #allocation1 [shape = 'u32[72,128]{1,0:T(1,128)}', space=vmem, size = 0x9000, scoped, tag = 'internal scratch']
  #allocation2 [shape = 'f32[4,128]{1,0:T(4,128)}', space=vmem, size = 0x800, scoped, tag = 'scratch operand']
  #allocation3 [shape = 'f32[4,128]{1,0:T(4,128)}', space=vmem, size = 0x800, scoped, tag = 'scratch operand']
  %s0 = inlined_call_operand.hbm [shape: f32[2,4,2,128], index: 0, kind: input, shape index: {}]
  %s1 = inlined_call_operand.hbm [shape: f32[2,4,2,128], index: 1, kind: input, shape index: {}]
  %s2 = inlined_call_operand.hbm [shape: f32[2,4,128], index: 2, kind: output, shape index: {0}]
  %s3 = inlined_call_operand.hbm [shape: f32[2,4,128], index: 3, kind: output, shape index: {1}]
  %4 = xla_tuple %s2, %s3
  %s5 = sld [smem:[#allocation0]]
  $region65: #{tpu_custom_call.1} parent=0
    _
  %s7 = ssub.s32 1, %s5
  %s8 = scalar_select 0, %s7, %s5
  $region1: #{tpu_custom_call.1} parent=0
    #allocation4 [shape = 'u8[8192]{0}', space=vmem, size = 0x2000, scoped, tag = 'input window, operand 0']
    #allocation5 [shape = 's32[2]{0}', space=sflag, size = 0x8, scoped, tag = 'scoped memory for tpu_custom_call.1']
    #allocation6 [shape = 's32[2]{0}', space=sflag, size = 0x8, scoped, tag = 'scoped memory for tpu_custom_call.1']
    #allocation7 [shape = 'u8[8192]{0}', space=vmem, size = 0x2000, scoped, tag = 'input window, operand 1']
    #allocation8 [shape = 's32[2]{0}', space=sflag, size = 0x8, scoped, tag = 'scoped memory for tpu_custom_call.1']
    #allocation9 [shape = 'u8[4096]{0}', space=vmem, size = 0x1000, scoped, tag = 'output window, operand 0']
    #allocation10 [shape = 'u8[4096]{0}', space=vmem, size = 0x1000, scoped, tag = 'output window, operand 1']
    #allocation11 [shape = 's32[2]{0}', space=sflag, size = 0x8, scoped, tag = 'scoped memory for tpu_custom_call.1']
    %9 = vsyncpa [#allocation5], 0
    %s10 = scalar_lea.sflag [#allocation5], 1
    %11 = vsyncpa %s10, 0
    %12 = vsyncpa [#allocation8], 0
    %s13 = scalar_lea.sflag [#allocation8], 1
    %14 = vsyncpa %s13, 0
    %15 = vsyncpa [#allocation6], 0
    %s16 = scalar_lea.sflag [#allocation6], 1
    %17 = vsyncpa %s16, 0
    %18 = vsyncpa [#allocation11], 0
    %s19 = scalar_lea.sflag [#allocation11], 1
    %20 = vsyncpa %s19, 0
    loop: start=0, step=1, limit=4
    $region2: #{tpu_custom_call.1} parent=1 // loop_pre_header
      _
    $region3: #{tpu_custom_call.1} parent=1 // loop_header
      %s22 = sphi 0, %s26
      %p23 = scmp.ge.s32.totalorder %s22, 4
      %s29 = sphi 0, %s41
      %s30 = sphi 0, %s37
      %s31 = sphi 0, %s29
      %s32 = sphi 0, %s30
      %s33 = sphi 0, %s31
      %s34 = sphi 0, %s32
      %s46 = sphi 0, %s48
      %s49 = sphi 0, %s46
      %s50 = sphi 0, %s49
      %s66 = sphi 0, %s50
      %s74 = sphi 0, %s76
      %s77 = sphi 0, %s74
      %s78 = sphi 0, %s77
      %s94 = sphi 0, %s78
      %s100 = sphi 0, %s102
      %s103 = sphi 0, %s100
      %s104 = sphi 0, %s103
      %s120 = sphi 0, %s104
      %s126 = sphi 0, %s128
      %s129 = sphi 0, %s126
      %s130 = sphi 0, %s129
      %s146 = sphi 0, %s130
    $region4: #{tpu_custom_call.1} parent=1 // loop_header_branch
      %25 = sbr.rel (%p23) target = $region8
    $region5: #{tpu_custom_call.1} parent=1 // loop_body
      %s27 = ssub.s32 %s22, 1
      %s28 = ssub.s32 %s22, 2
      %s35 = sadd.s32 1, %s30
      %p36 = scmp.ge.s32.totalorder %s35, 1
      %s37 = scalar_select %p36, 0, %s35
      %s38 = sadd.s32 1, %s29
      %s39 = scalar_select %p36, %s38, %s29
      %p40 = scmp.ge.s32.totalorder %s39, 2
      %s41 = scalar_select %p40, 0, %s39
      %s42 = ssub.s32 %s29, %s41
      %s43 = ssub.s32 %s30, %s37
      %s44 = sor.u32 %s42, %s43
      %p45 = scmp.eq.s32.totalorder %s44, 0
      %s47 = sadd.s32 %s46, 1
      %s48 = scalar_select %p45, %s46, %s47
      %p51 = pneg %p45
      %p52 = scmp.eq.s32.totalorder %s22, 1
      %p53 = por %p51, %p52
      %p54 = scmp.ne.s32.totalorder %s46, %s49
      %p55 = scmp.eq.s32.totalorder %s22, 0
      %p56 = por %p54, %p55
      %p57 = scmp.ne.s32.totalorder %s46, %s49
      %p58 = scmp.eq.s32.totalorder %s27, 1
      %p59 = por %p57, %p58
      %p60 = scmp.ne.s32.totalorder %s49, %s50
      %p61 = scmp.eq.s32.totalorder %s27, 0
      %p62 = por %p60, %p61
      %p63 = scmp.ne.s32.totalorder %s49, %s50
      %p64 = scmp.eq.s32.totalorder %s28, 1
      %p65 = por %p63, %p64
      %p67 = scmp.ne.s32.totalorder %s50, %s66
      %p68 = scmp.eq.s32.totalorder %s28, 0
      %p69 = por %p67, %p68
      %s70 = ssub.s32 %s29, %s41
      %s71 = ssub.s32 %s30, %s37
      %s72 = sor.u32 %s70, %s71
      %p73 = scmp.eq.s32.totalorder %s72, 0
      %s75 = sadd.s32 %s74, 1
      %s76 = scalar_select %p73, %s74, %s75
      %p79 = pneg %p73
      %p80 = scmp.eq.s32.totalorder %s22, 1
      %p81 = por %p79, %p80
      %p82 = scmp.ne.s32.totalorder %s74, %s77
      %p83 = scmp.eq.s32.totalorder %s22, 0
      %p84 = por %p82, %p83
      %p85 = scmp.ne.s32.totalorder %s74, %s77
      %p86 = scmp.eq.s32.totalorder %s27, 1
      %p87 = por %p85, %p86
      %p88 = scmp.ne.s32.totalorder %s77, %s78
      %p89 = scmp.eq.s32.totalorder %s27, 0
      %p90 = por %p88, %p89
      %p91 = scmp.ne.s32.totalorder %s77, %s78
      %p92 = scmp.eq.s32.totalorder %s28, 1
      %p93 = por %p91, %p92
      %p95 = scmp.ne.s32.totalorder %s78, %s94
      %p96 = scmp.eq.s32.totalorder %s28, 0
      %p97 = por %p95, %p96
      %s98 = ssub.s32 %s29, %s41
      %p99 = scmp.eq.s32.totalorder %s98, 0
      %s101 = sadd.s32 %s100, 1
      %s102 = scalar_select %p99, %s100, %s101
      %p105 = pneg %p99
      %p106 = scmp.eq.s32.totalorder %s22, 1
      %p107 = por %p105, %p106
      %p108 = scmp.ne.s32.totalorder %s100, %s103
      %p109 = scmp.eq.s32.totalorder %s22, 0
      %p110 = por %p108, %p109
      %p111 = scmp.ne.s32.totalorder %s100, %s103
      %p112 = scmp.eq.s32.totalorder %s27, 1
      %p113 = por %p111, %p112
      %p114 = scmp.ne.s32.totalorder %s103, %s104
      %p115 = scmp.eq.s32.totalorder %s27, 0
      %p116 = por %p114, %p115
      %p117 = scmp.ne.s32.totalorder %s103, %s104
      %p118 = scmp.eq.s32.totalorder %s28, 1
      %p119 = por %p117, %p118
      %p121 = scmp.ne.s32.totalorder %s104, %s120
      %p122 = scmp.eq.s32.totalorder %s28, 0
      %p123 = por %p121, %p122
      %s124 = ssub.s32 %s29, %s41
      %p125 = scmp.eq.s32.totalorder %s124, 0
      %s127 = sadd.s32 %s126, 1
      %s128 = scalar_select %p125, %s126, %s127
      %p131 = pneg %p125
      %p132 = scmp.eq.s32.totalorder %s22, 1
      %p133 = por %p131, %p132
      %p134 = scmp.ne.s32.totalorder %s126, %s129
      %p135 = scmp.eq.s32.totalorder %s22, 0
      %p136 = por %p134, %p135
      %p137 = scmp.ne.s32.totalorder %s126, %s129
      %p138 = scmp.eq.s32.totalorder %s27, 1
      %p139 = por %p137, %p138
      %p140 = scmp.ne.s32.totalorder %s129, %s130
      %p141 = scmp.eq.s32.totalorder %s27, 0
      %p142 = por %p140, %p141
      %p143 = scmp.ne.s32.totalorder %s129, %s130
      %p144 = scmp.eq.s32.totalorder %s28, 1
      %p145 = por %p143, %p144
      %p147 = scmp.ne.s32.totalorder %s130, %s146
      %p148 = scmp.eq.s32.totalorder %s28, 0
      %p149 = por %p147, %p148
      %p150 = scmp.le.s32.totalorder 1, %s22
      %p151 = scmp.lt.s32.totalorder %s22, 3
      %p152 = pnand %p150, %p151
      %p153 = pneg %p152
      // Predicated region
      $region9: #{tpu_custom_call.1} parent=5 // pred_check
        _
      $region10: #{tpu_custom_call.1} parent=5 // pred_check_branch
        %155 = sbr.rel (%p152) target = $region12
      $region11: #{tpu_custom_call.1} parent=5 // pred_region
        %s156 = ssub.s32 %s22, 1
      $region12: #{tpu_custom_call.1} parent=5 // pred_fallthru
        _
      %p157 = scmp.lt.s32.totalorder %s22, 2
      // Predicated region
      $region13: #{tpu_custom_call.1} parent=5 // pred_check
        %p158 = pneg %p157
      $region14: #{tpu_custom_call.1} parent=5 // pred_check_branch
        %160 = sbr.rel (%p158) target = $region16
      $region15: #{tpu_custom_call.1} parent=5 // pred_region
        // Predicated region
        $region17: #{tpu_custom_call.1} parent=15 // pred_check
          %p161 = pneg %p56
        $region18: #{tpu_custom_call.1} parent=15 // pred_check_branch
          %163 = sbr.rel (%p161) target = $region20
        $region19: #{tpu_custom_call.1} parent=15 // pred_region
          %s164 = sand.u32 %s46, 1
          %s165 = scalar_lea.sflag [#allocation5], %s164
          %s166 = sand.u32 %s46, 1
          %s167 = smul.addr %s166, 8
          %s168 = scalar_lea.vmem [#allocation4], %s167
          %170 = vsyncadd %s165, 0
          %s171 = smul.addr %s29, 4
          %s172 = sadd.s32 %s30, %s171
          %s173 = smul.addr %s172, 2
          %s174 = scalar_lea.hbm %s0, %s173
          %s175 = sshll.u32 %s174, 4
          %s176 = int_to_ptr.hbm [resolvable:$true] %s175
          %s177 = sshll.u32 %s168, 4
          %s178 = int_to_ptr.vmem [resolvable:$true] %s177
          %183 = dma.hbm_to_vmem [thread:$0]  %s176, 128, %s178, %s165, 32, 32, 2
        $region20: #{tpu_custom_call.1} parent=15 // pred_fallthru
          _
        // Predicated region
        $region21: #{tpu_custom_call.1} parent=15 // pred_check
          %p184 = pneg %p84
        $region22: #{tpu_custom_call.1} parent=15 // pred_check_branch
          %186 = sbr.rel (%p184) target = $region24
        $region23: #{tpu_custom_call.1} parent=15 // pred_region
          %s187 = sand.u32 %s74, 1
          %s188 = scalar_lea.sflag [#allocation8], %s187
          %s189 = sand.u32 %s74, 1
          %s190 = smul.addr %s189, 8
          %s191 = scalar_lea.vmem [#allocation7], %s190
          %193 = vsyncadd %s188, 0
          %s194 = smul.addr %s29, 4
          %s195 = sadd.s32 %s30, %s194
          %s196 = smul.addr %s195, 2
          %s197 = scalar_lea.hbm %s1, %s196
          %s198 = sshll.u32 %s197, 4
          %s199 = int_to_ptr.hbm [resolvable:$true] %s198
          %s200 = sshll.u32 %s191, 4
          %s201 = int_to_ptr.vmem [resolvable:$true] %s200
          %206 = dma.hbm_to_vmem [thread:$0]  %s199, 128, %s201, %s188, 32, 32, 2
        $region24: #{tpu_custom_call.1} parent=15 // pred_fallthru
          _
      $region16: #{tpu_custom_call.1} parent=5 // pred_fallthru
        _
      %p207 = scmp.le.s32.totalorder 1, %s22
      %p208 = scmp.lt.s32.totalorder %s22, 3
      %p209 = pnand %p207, %p208
      %p210 = pneg %p209
      // Predicated region
      $region25: #{tpu_custom_call.1} parent=5 // pred_check
        _
      $region26: #{tpu_custom_call.1} parent=5 // pred_check_branch
        %212 = sbr.rel (%p209) target = $region28
      $region27: #{tpu_custom_call.1} parent=5 // pred_region
        %s213 = ssub.s32 %s22, 1
        %s214 = sand.u32 %s49, 1
        %s215 = scalar_lea.sflag [#allocation5], %s214
        %s216 = sand.u32 %s49, 1
        %s217 = smul.addr %s216, 8
        %s218 = scalar_lea.vmem [#allocation4], %s217
        // Predicated region
        $region29: #{tpu_custom_call.1} parent=27 // pred_check
          %p219 = pneg %p62
        $region30: #{tpu_custom_call.1} parent=27 // pred_check_branch
          %221 = sbr.rel (%p219) target = $region32
        $region31: #{tpu_custom_call.1} parent=27 // pred_region
          %223 = dma.done %s215, 128
        $region32: #{tpu_custom_call.1} parent=27 // pred_fallthru
          _
        %s224 = sand.u32 %s77, 1
        %s225 = scalar_lea.sflag [#allocation8], %s224
        %s226 = sand.u32 %s77, 1
        %s227 = smul.addr %s226, 8
        %s228 = scalar_lea.vmem [#allocation7], %s227
        // Predicated region
        $region33: #{tpu_custom_call.1} parent=27 // pred_check
          %p229 = pneg %p90
        $region34: #{tpu_custom_call.1} parent=27 // pred_check_branch
          %231 = sbr.rel (%p229) target = $region36
        $region35: #{tpu_custom_call.1} parent=27 // pred_region
          %233 = dma.done %s225, 128
        $region36: #{tpu_custom_call.1} parent=27 // pred_fallthru
          _
        %s234 = sand.u32 %s49, 1
        %s235 = scalar_lea.sflag [#allocation5], %s234
        %s236 = sand.u32 %s49, 1
        %s237 = smul.addr %s236, 8
        %s238 = scalar_lea.vmem [#allocation4], %s237
        %p239 = pneg %p62
        %p240 = pneg %p59
        %s241 = sand.u32 %s77, 1
        %s242 = scalar_lea.sflag [#allocation8], %s241
        %s243 = sand.u32 %s77, 1
        %s244 = smul.addr %s243, 8
        %s245 = scalar_lea.vmem [#allocation7], %s244
        %p246 = pneg %p90
        %p247 = pneg %p87
        %p248 = pneg %p116
        %p249 = pneg %p113
        %s250 = sand.u32 %s103, 1
        %s251 = scalar_lea.sflag [#allocation6], %s250
        %s252 = sand.u32 %s103, 1
        %s253 = smul.addr %s252, 4
        %s254 = scalar_lea.vmem [#allocation9], %s253
        %p255 = pneg %p142
        %p256 = pneg %p139
        %s257 = sand.u32 %s129, 1
        %s258 = scalar_lea.sflag [#allocation11], %s257
        %s259 = sand.u32 %s129, 1
        %s260 = smul.addr %s259, 4
        %s261 = scalar_lea.vmem [#allocation10], %s260
        %p262 = scmp.eq.s32.totalorder %s32, 0
        // Predicated region
        $region37: #{tpu_custom_call.1} parent=27 // pred_check
          %p263 = pneg %p262
        $region38: #{tpu_custom_call.1} parent=27 // pred_check_branch
          %265 = sbr.rel (%p263) target = $region40
        $region39: #{tpu_custom_call.1} parent=27 // pred_region
          %266 = vst [vmem:[#allocation2] sm:$0xf] 0.0
          %267 = vst [vmem:[#allocation3] sm:$0xf] 0.0
        $region40: #{tpu_custom_call.1} parent=27 // pred_fallthru
          _
        %v268 = vld [vmem:[%s218] sm:$0x3]
        %v269 = vld [vmem:[%s218 + $0x2] sm:$0x3]
        %v270 = vld [vmem:[%s218 + $0x4] sm:$0x3]
        %v271 = vld [vmem:[%s218 + $0x6] sm:$0x3]
        %v272 = vld [vmem:[%s228] sm:$0x3]
        %v273 = vld [vmem:[%s228 + $0x2] sm:$0x3]
        %v274 = vld [vmem:[%s228 + $0x4] sm:$0x3]
        %v275 = vld [vmem:[%s228 + $0x6] sm:$0x3]
        %v276 = vld [vmem:[#allocation2] sm:$0xf]
        %v277 = vmul.f32 %v268, %v272
        %v278 = vmul.f32 %v269, %v273
        %v279 = vmul.f32 %v270, %v274
        %v280 = vmul.f32 %v271, %v275
        %vm281 = vcmask 1041408
        %v282 = vsel %vm281, %v277, 0.0
        %v283 = vrot.slane %v282, 4
        %v284 = vadd.f32 %v282, %v283
        %v285 = vrot.slane %v284, 2
        %v286 = vadd.f32 %v284, %v285
        %v287 = vrot.slane %v286, 1
        %v288 = vadd.f32 %v286, %v287
        %v289 = vsel %vm281, %v278, 0.0
        %v290 = vrot.slane %v289, 4
        %v291 = vadd.f32 %v289, %v290
        %v292 = vrot.slane %v291, 2
        %v293 = vadd.f32 %v291, %v292
        %v294 = vrot.slane %v293, 1
        %v295 = vadd.f32 %v293, %v294
        %v296 = vsel %vm281, %v279, 0.0
        %v297 = vrot.slane %v296, 4
        %v298 = vadd.f32 %v296, %v297
        %v299 = vrot.slane %v298, 2
        %v300 = vadd.f32 %v298, %v299
        %v301 = vrot.slane %v300, 1
        %v302 = vadd.f32 %v300, %v301
        %v303 = vsel %vm281, %v280, 0.0
        %v304 = vrot.slane %v303, 4
        %v305 = vadd.f32 %v303, %v304
        %v306 = vrot.slane %v305, 2
        %v307 = vadd.f32 %v305, %v306
        %v308 = vrot.slane %v307, 1
        %v309 = vadd.f32 %v307, %v308
        %vm314 = vcmask 1041409
        %v315 = vsel %vm314, %v295, %v288
        %vm316 = vcmask 1042434
        %v317 = vsel %vm316, %v302, %v315
        %vm318 = vcmask 1043459
        %v319 = vsel %vm318, %v309, %v317
        %v321 = vadd.f32 %v276, %v319
        %322 = vst [vmem:[#allocation2] sm:$0xf] %v321
        %v323 = vld [vmem:[#allocation3] sm:$0xf]
        %v324 = vadd.f32 %v268, %v272
        %v325 = vadd.f32 %v269, %v273
        %v326 = vadd.f32 %v270, %v274
        %v327 = vadd.f32 %v271, %v275
        %v328 = vsel %vm281, %v324, 0.0
        %v329 = vrot.slane %v328, 4
        %v330 = vadd.f32 %v328, %v329
        %v331 = vrot.slane %v330, 2
        %v332 = vadd.f32 %v330, %v331
        %v333 = vrot.slane %v332, 1
        %v334 = vadd.f32 %v332, %v333
        %v335 = vsel %vm281, %v325, 0.0
        %v336 = vrot.slane %v335, 4
        %v337 = vadd.f32 %v335, %v336
        %v338 = vrot.slane %v337, 2
        %v339 = vadd.f32 %v337, %v338
        %v340 = vrot.slane %v339, 1
        %v341 = vadd.f32 %v339, %v340
        %v342 = vsel %vm281, %v326, 0.0
        %v343 = vrot.slane %v342, 4
        %v344 = vadd.f32 %v342, %v343
        %v345 = vrot.slane %v344, 2
        %v346 = vadd.f32 %v344, %v345
        %v347 = vrot.slane %v346, 1
        %v348 = vadd.f32 %v346, %v347
        %v349 = vsel %vm281, %v327, 0.0
        %v350 = vrot.slane %v349, 4
        %v351 = vadd.f32 %v349, %v350
        %v352 = vrot.slane %v351, 2
        %v353 = vadd.f32 %v351, %v352
        %v354 = vrot.slane %v353, 1
        %v355 = vadd.f32 %v353, %v354
        %v360 = vsel %vm314, %v341, %v334
        %v361 = vsel %vm316, %v348, %v360
        %v362 = vsel %vm318, %v355, %v361
        %v364 = vadd.f32 %v323, %v362
        %365 = vst [vmem:[#allocation3] sm:$0xf] %v364
        // Predicated region
        $region41: #{tpu_custom_call.1} parent=27 // pred_check
          %p366 = pneg %p262
        $region42: #{tpu_custom_call.1} parent=27 // pred_check_branch
          %368 = sbr.rel (%p366) target = $region44
        $region43: #{tpu_custom_call.1} parent=27 // pred_region
          %v369 = vld [vmem:[#allocation2] sm:$0xf]
          %370 = vst [vmem:[%s254] sm:$0xf] %v369
          %v371 = vld [vmem:[#allocation3] sm:$0xf]
          %372 = vst [vmem:[%s261] sm:$0xf] %v371
        $region44: #{tpu_custom_call.1} parent=27 // pred_fallthru
          _
        %s373 = sand.u32 %s103, 1
        %s374 = scalar_lea.sflag [#allocation6], %s373
        %s375 = sand.u32 %s103, 1
        %s376 = smul.addr %s375, 4
        %s377 = scalar_lea.vmem [#allocation9], %s376
        %s378 = sand.u32 %s129, 1
        %s379 = scalar_lea.sflag [#allocation11], %s378
        %s380 = sand.u32 %s129, 1
        %s381 = smul.addr %s380, 4
        %s382 = scalar_lea.vmem [#allocation10], %s381
        // Predicated region
        $region45: #{tpu_custom_call.1} parent=27 // pred_check
          %p383 = pneg %p113
        $region46: #{tpu_custom_call.1} parent=27 // pred_check_branch
          %385 = sbr.rel (%p383) target = $region48
        $region47: #{tpu_custom_call.1} parent=27 // pred_region
          %387 = vsyncadd %s374, 0
          %s388 = smul.addr %s31, 4
          %s389 = scalar_lea.hbm %s2, %s388
          %s391 = sshll.u32 %s377, 4
          %s392 = int_to_ptr.vmem [resolvable:$true] %s391
          %s393 = sshll.u32 %s389, 4
          %s394 = int_to_ptr.hbm [resolvable:$true] %s393
          %396 = dma.vmem_to_hbm [thread:$0]  %s392, 64, %s394, %s374
        $region48: #{tpu_custom_call.1} parent=27 // pred_fallthru
          _
        // Predicated region
        $region49: #{tpu_custom_call.1} parent=27 // pred_check
          %p397 = pneg %p139
        $region50: #{tpu_custom_call.1} parent=27 // pred_check_branch
          %399 = sbr.rel (%p397) target = $region52
        $region51: #{tpu_custom_call.1} parent=27 // pred_region
          %401 = vsyncadd %s379, 0
          %s402 = smul.addr %s31, 4
          %s403 = scalar_lea.hbm %s3, %s402
          %s405 = sshll.u32 %s382, 4
          %s406 = int_to_ptr.vmem [resolvable:$true] %s405
          %s407 = sshll.u32 %s403, 4
          %s408 = int_to_ptr.hbm [resolvable:$true] %s407
          %410 = dma.vmem_to_hbm [thread:$0]  %s406, 64, %s408, %s379
        $region52: #{tpu_custom_call.1} parent=27 // pred_fallthru
          _
      $region28: #{tpu_custom_call.1} parent=5 // pred_fallthru
        _
      %p411 = scmp.le.s32.totalorder 2, %s22
      // Predicated region
      $region53: #{tpu_custom_call.1} parent=5 // pred_check
        %p412 = pneg %p411
      $region54: #{tpu_custom_call.1} parent=5 // pred_check_branch
        %414 = sbr.rel (%p412) target = $region56
      $region55: #{tpu_custom_call.1} parent=5 // pred_region
        %s415 = ssub.s32 %s22, 2
        // Predicated region
        $region57: #{tpu_custom_call.1} parent=55 // pred_check
          %p416 = pneg %p119
        $region58: #{tpu_custom_call.1} parent=55 // pred_check_branch
          %418 = sbr.rel (%p416) target = $region60
        $region59: #{tpu_custom_call.1} parent=55 // pred_region
          %s419 = sand.u32 %s104, 1
          %s420 = scalar_lea.sflag [#allocation6], %s419
          %s421 = sand.u32 %s104, 1
          %s422 = smul.addr %s421, 4
          %s423 = scalar_lea.vmem [#allocation9], %s422
          %425 = dma.done %s420, 64
        $region60: #{tpu_custom_call.1} parent=55 // pred_fallthru
          _
        // Predicated region
        $region61: #{tpu_custom_call.1} parent=55 // pred_check
          %p426 = pneg %p145
        $region62: #{tpu_custom_call.1} parent=55 // pred_check_branch
          %428 = sbr.rel (%p426) target = $region64
        $region63: #{tpu_custom_call.1} parent=55 // pred_region
          %s429 = sand.u32 %s130, 1
          %s430 = scalar_lea.sflag [#allocation11], %s429
          %s431 = sand.u32 %s130, 1
          %s432 = smul.addr %s431, 4
          %s433 = scalar_lea.vmem [#allocation10], %s432
          %435 = dma.done %s430, 64
        $region64: #{tpu_custom_call.1} parent=55 // pred_fallthru
          _
      $region56: #{tpu_custom_call.1} parent=5 // pred_fallthru
        _
    $region6: #{tpu_custom_call.1} parent=1 // loop_footer
      %s26 = sadd.s32 1, %s22
    $region7: #{tpu_custom_call.1} parent=1 // loop_footer_branch
      %21 = sbr.rel target = $region3
    $region8: #{tpu_custom_call.1} parent=1 // loop_exit
      _
    %436 = vsyncpa [#allocation5], 1
    %s437 = scalar_lea.sflag [#allocation5], 1
    %438 = vsyncpa %s437, 1
    %439 = vsyncpa [#allocation8], 1
    %s440 = scalar_lea.sflag [#allocation8], 1
    %441 = vsyncpa %s440, 1
    %442 = vsyncpa [#allocation6], 1
    %s443 = scalar_lea.sflag [#allocation6], 1
    %444 = vsyncpa %s443, 1
    %445 = vsyncpa [#allocation11], 1
    %s446 = scalar_lea.sflag [#allocation11], 1
    %447 = vsyncpa %s446, 1

</llo_original>
